<compile_context>
chip_gen: v5e
topology: v5e:2x2
jax: 0.10.0
libtpu: 0.0.40
codegen_flags: <defaults>
</compile_context>

<pallas_src>
import math

import jax
import jax.numpy as jnp
from jax.experimental import pallas as pl
from jax.experimental.pallas import tpu as pltpu


# ---------------------------------------------------------------------------
# helpers
# ---------------------------------------------------------------------------
def _round_up(n, m):
    return ((n + m - 1) // m) * m


def _pad_dim(x, axis, target):
    pad = target - x.shape[axis]
    if pad <= 0:
        return x
    widths = [(0, 0)] * x.ndim
    widths[axis] = (0, pad)
    return jnp.pad(x, widths)


def _seq_tile(L, max_tile, min_mult):
    """Return (tile, padded_L). `max_tile` is a multiple of 128 >= min_mult."""
    Lp = _round_up(L, min_mult)
    if Lp <= max_tile:
        return Lp, Lp                # single tile covering the padded axis
    return max_tile, _round_up(L, max_tile)


def _largest_divisor_leq(n, cap):
    for d in range(max(1, min(n, cap)), 0, -1):
        if n % d == 0:
            return d
    return 1


def _vmem_limit_bytes():
    # Physical VMEM: 128 MiB (v5e/v6e), 64 MiB (v7x). Leave headroom for the
    # compiler's own scratch; tiles are planned against ~85% of this limit.
    cap = 64 * 1024 * 1024
    try:
        info = pltpu.get_tpu_info()
        got = getattr(info, "vmem_capacity_bytes", None)
        if got:
            cap = int(got)
    except Exception:
        pass
    return min(cap * 3 // 4, 96 * 1024 * 1024)


def _plan_tiles(to_candidates, tile_candidates, bytes_fn, budget):
    """Largest (seq_tile, o_tile) whose estimated VMEM footprint fits the budget."""
    for to in to_candidates:
        for t in tile_candidates:
            if bytes_fn(t, to) <= budget:
                return t, to
    return tile_candidates[-1], to_candidates[-1]


def _flatten_weight(w, D1, D2, TO, Op):
    """(O, d1, d2) -> zero-pad -> (Op//TO, D1, TO*D2), W_flat[g,i,o*D2+j]=W[g*TO+o,i,j]."""
    wp = _pad_dim(_pad_dim(_pad_dim(w, 1, D1), 2, D2), 0, Op)
    wp = wp.reshape(Op // TO, TO, D1, D2)
    wp = jnp.transpose(wp, (0, 2, 1, 3))
    return wp.reshape(Op // TO, D1, TO * D2)


# ---------------------------------------------------------------------------
# expand=True kernel:
#   grid = (O-tiles, B, Lx-tiles, Ly-tiles), Ly innermost ('arbitrary').
#   t = x1_tile @ W_flat[o-tile] (one wide MXU pass over TO o-planes) is held in
#   VMEM scratch and reused across Ly tiles; each o-plane is contracted against
#   the shared x2 Ly-tile via dot_general over D2 (no x2.T transpose).
# ---------------------------------------------------------------------------
def _bilinear_expand_kernel(x1_ref, w_ref, x2_ref, o_ref, t_ref):
    TO = o_ref.shape[1]
    D2 = x2_ref.shape[2]

    @pl.when(pl.program_id(3) == 0)            # innermost (Ly) index reset
    def _():
        t = jnp.dot(x1_ref[0], w_ref[0], preferred_element_type=jnp.float32)
        t_ref[...] = t.astype(t_ref.dtype)      # (TLx, TO*D2)

    x2 = x2_ref[0]                               # (TLy, D2) shared by all TO planes
    for o in range(TO):                          # static, small
        s = jax.lax.dot_general(
            t_ref[:, o * D2:(o + 1) * D2], x2,
            dimension_numbers=(((1,), (1,)), ((), ())),   # contract D2, no x2.T
            preferred_element_type=jnp.float32)
        o_ref[0, o] = s.astype(o_ref.dtype)      # (TLx, TLy)


def bilinear_expand(x1, w, x2, *, out_dtype=jnp.float32, seq_tile_cap=512):
    B, Lx, d1 = x1.shape
    O, dw1, d2 = w.shape
    B2, Ly, dx2 = x2.shape
    assert dw1 == d1 and dx2 == d2 and B2 == B

    D1 = _round_up(d1, 128)
    D2 = _round_up(d2, 128)
    in_b = jnp.dtype(x1.dtype).itemsize
    out_b = jnp.dtype(out_dtype).itemsize

    limit = _vmem_limit_bytes()
    seq_tile_cap = max(128, _round_up(int(seq_tile_cap), 128))
    tiles = [t for t in (512, 256, 128) if t <= seq_tile_cap] or [128]

    # Divisors of O (largest first, <= 8): no padded o-planes, and TO planes share
    # one x2 tile per step (cuts x2 HBM re-reads by TO on the mem-bound path).
    to_cands = []
    d = _largest_divisor_leq(O, 8)
    while True:
        to_cands.append(d)
        if d == 1:
            break
        d = _largest_divisor_leq(O, d - 1)

    def vmem_bytes(T, to):
        return (2 * T * D1 * in_b              # x1 block (double buffered)
                + 2 * D1 * to * D2 * in_b      # W_flat block
                + 2 * T * D2 * in_b            # x2 block
                + 2 * to * T * T * out_b       # output block
                + T * to * D2 * in_b           # t scratch
                + T * to * D2 * 4 + T * T * 4)  # f32 intermediates slack

    T, TO = _plan_tiles(to_cands, tiles, vmem_bytes, int(limit * 0.85))

    TLx, Lxp = _seq_tile(Lx, T, 8)
    TLy, Lyp = _seq_tile(Ly, T, 128)            # lane-dense output writes
    Op = _round_up(O, TO)                        # == O (TO divides O)

    x1p = _pad_dim(_pad_dim(x1, 2, D1), 1, Lxp)
    x2p = _pad_dim(_pad_dim(x2, 2, D2), 1, Lyp)
    wf = _flatten_weight(w, D1, D2, TO, Op)

    # O outermost: the weight block is DMA'd once per o-tile (not once per batch).
    grid = (Op // TO, B, Lxp // TLx, Lyp // TLy)
    out = pl.pallas_call(
        _bilinear_expand_kernel,
        out_shape=jax.ShapeDtypeStruct((B, Op, Lxp, Lyp), out_dtype),
        grid_spec=pltpu.PrefetchScalarGridSpec(
            num_scalar_prefetch=0,
            grid=grid,
            in_specs=[
                pl.BlockSpec((1, TLx, D1), lambda o, b, lx, ly: (b, lx, 0)),
                pl.BlockSpec((1, D1, TO * D2), lambda o, b, lx, ly: (o, 0, 0)),
                pl.BlockSpec((1, TLy, D2), lambda o, b, lx, ly: (b, ly, 0)),
            ],
            out_specs=pl.BlockSpec(
                (1, TO, TLx, TLy), lambda o, b, lx, ly: (b, o, lx, ly)),
            scratch_shapes=[pltpu.VMEM((TLx, TO * D2), x1p.dtype)],
        ),
        compiler_params=pltpu.CompilerParams(
            dimension_semantics=("parallel", "parallel", "parallel", "arbitrary"),
            vmem_limit_bytes=limit,
        ),
    )(x1p, wf, x2p)
    return out[:, :O, :Lx, :Ly]


# ---------------------------------------------------------------------------
# expand=False kernel (F.bilinear):
#   grid = (O-tiles, B, L-tiles); one wide MXU pass x1 @ W_flat per step, then a
#   per-o multiply/row-reduce against x2 written straight into the lane-dense
#   (TO, TL) output block. Output is emitted as (B, O, L) and transposed back.
# ---------------------------------------------------------------------------
def _bilinear_noexpand_kernel(x1_ref, w_ref, x2_ref, o_ref):
    TO = o_ref.shape[1]
    D2 = x2_ref.shape[2]
    t = jnp.dot(x1_ref[0], w_ref[0], preferred_element_type=jnp.float32)  # (TL, TO*D2)
    x2 = x2_ref[0]                                                        # (TL, D2)
    for o in range(TO):                                                   # static, small
        r = jnp.sum(t[:, o * D2:(o + 1) * D2] * x2, axis=-1)              # (TL,) f32
        o_ref[0, o, :] = r.astype(o_ref.dtype)


def bilinear_noexpand(x1, w, x2, *, out_dtype=jnp.float32, seq_tile_cap=512):
    B, L, d1 = x1.shape
    O, dw1, d2 = w.shape
    assert dw1 == d1 and x2.shape == (B, L, d2)

    D1 = _round_up(d1, 128)
    D2 = _round_up(d2, 128)
    in_b = jnp.dtype(x1.dtype).itemsize
    out_b = jnp.dtype(out_dtype).itemsize

    limit = _vmem_limit_bytes()
    seq_tile_cap = max(128, _round_up(int(seq_tile_cap), 128))
    tiles = [t for t in (512, 256, 128) if t <= seq_tile_cap] or [128]

    # Output block is (1, TO, TL): TO must be a multiple of 8 or the full O dim.
    to_cands = [O] if O <= 8 else [8]

    def vmem_bytes(T, to):
        return (2 * T * D1 * in_b + 2 * D1 * to * D2 * in_b
                + 2 * T * D2 * in_b + 2 * to * T * out_b
                + 2 * T * to * D2 * 4)          # f32 t intermediate slack

    T, TO = _plan_tiles(to_cands, tiles, vmem_bytes, int(limit * 0.85))

    TL, Lp = _seq_tile(L, T, 128)               # lane-dense output writes
    Op = _round_up(O, TO)                        # padded o-planes have zero weight

    x1p = _pad_dim(_pad_dim(x1, 2, D1), 1, Lp)
    x2p = _pad_dim(_pad_dim(x2, 2, D2), 1, Lp)
    wf = _flatten_weight(w, D1, D2, TO, Op)

    grid = (Op // TO, B, Lp // TL)
    out = pl.pallas_call(
        _bilinear_noexpand_kernel,
        out_shape=jax.ShapeDtypeStruct((B, Op, Lp), out_dtype),
        grid_spec=pltpu.PrefetchScalarGridSpec(
            num_scalar_prefetch=0,
            grid=grid,
            in_specs=[
                pl.BlockSpec((1, TL, D1), lambda o, b, l: (b, l, 0)),
                pl.BlockSpec((1, D1, TO * D2), lambda o, b, l: (o, 0, 0)),
                pl.BlockSpec((1, TL, D2), lambda o, b, l: (b, l, 0)),
            ],
            out_specs=pl.BlockSpec((1, TO, TL), lambda o, b, l: (b, o, l)),
        ),
        compiler_params=pltpu.CompilerParams(
            dimension_semantics=("parallel", "parallel", "parallel"),
            vmem_limit_bytes=limit,
        ),
    )(x1p, wf, x2p)
    # TODO(synk): when O >= 128 it is cheaper to emit (B, L, O) directly
    # (lane-dense in O) and skip this wrapper transpose pass.
    return jnp.transpose(out, (0, 2, 1))[:, :L, :O]


# ---------------------------------------------------------------------------
# Module-equivalent wrapper
# ---------------------------------------------------------------------------
class BilinearPallas:
    def __init__(self, in1_features, in2_features, out_features,
                 expand=False, bias_x=True, bias_y=True,
                 compute_dtype=jnp.bfloat16, out_dtype=jnp.float32, key=None):
        self.expand = expand
        self.bias_x = bias_x
        self.bias_y = bias_y
        self.compute_dtype = compute_dtype
        self.out_dtype = out_dtype
        d1 = in1_features + int(bias_x)
        d2 = in2_features + int(bias_y)
        bound = 1.0 / math.sqrt(d1)
        key = jax.random.PRNGKey(0) if key is None else key
        # deterministic uniform(-bound, bound), same shape as the torch Parameter
        self.weight = jax.random.uniform(
            key, (out_features, d1, d2), dtype=jnp.float32,
            minval=-bound, maxval=bound)

    def __call__(self, x1, x2):
        if self.bias_x:
            x1 = jnp.concatenate([x1, jnp.ones_like(x1[..., :1])], axis=-1)
        if self.bias_y:
            x2 = jnp.concatenate([x2, jnp.ones_like(x2[..., :1])], axis=-1)
        cd = self.compute_dtype
        x1c = x1.astype(cd)
        x2c = x2.astype(cd)
        wc = self.weight.astype(cd)
        if self.expand:
            return bilinear_expand(x1c, wc, x2c, out_dtype=self.out_dtype)
        return bilinear_noexpand(x1c, wc, x2c, out_dtype=self.out_dtype)


if __name__ == "__main__":
    key = jax.random.PRNGKey(0)
    k_w, k_w2, k1, k2, k3, k4 = jax.random.split(key, 6)

    # --- config 1: tiny shapes, f32 compute, tight-ish tolerance -------------
    B, L, IN1, IN2, OUT = 2, 8, 7, 7, 4
    x1 = jax.random.normal(k1, (B, L, IN1), dtype=jnp.float32)
    x2 = jax.random.normal(k2, (B, L, IN2), dtype=jnp.float32)
    x1b = jnp.concatenate([x1, jnp.ones_like(x1[..., :1])], axis=-1)
    x2b = jnp.concatenate([x2, jnp.ones_like(x2[..., :1])], axis=-1)

    mod_e = BilinearPallas(IN1, IN2, OUT, expand=True,
                           compute_dtype=jnp.float32, key=k_w)
    out_e = jax.block_until_ready(mod_e(x1, x2))
    ref_e = jnp.einsum('bxi,oij,byj->boxy', x1b, mod_e.weight, x2b,
                       precision=jax.lax.Precision.HIGHEST)
    assert out_e.shape == (B, OUT, L, L)
    assert jnp.allclose(out_e, ref_e, atol=2e-2, rtol=2e-2), (
        float(jnp.max(jnp.abs(out_e - ref_e))))

    mod_n = BilinearPallas(IN1, IN2, OUT, expand=False,
                           compute_dtype=jnp.float32, key=k_w)
    out_n = jax.block_until_ready(mod_n(x1, x2))
    ref_n = jnp.einsum('bli,oij,blj->blo', x1b, mod_n.weight, x2b,
                       precision=jax.lax.Precision.HIGHEST)
    assert out_n.shape == (B, L, OUT)
    assert jnp.allclose(out_n, ref_n, atol=2e-2, rtol=2e-2), (
        float(jnp.max(jnp.abs(out_n - ref_n))))

    # --- config 2: default bf16 MXU operands + f32 accumulation --------------
    mod_b = BilinearPallas(IN1, IN2, OUT, expand=True, key=k_w)   # bf16 default
    out_b = jax.block_until_ready(mod_b(x1, x2))
    assert out_b.shape == (B, OUT, L, L)
    assert jnp.allclose(out_b, ref_e, atol=2e-1, rtol=1e-1), (
        float(jnp.max(jnp.abs(out_b - ref_e))))

    # --- config 3: multi-tile grid (several L tiles, several o-tiles) --------
    B2_, L2, IN1b, IN2b, OUT2 = 2, 200, 30, 22, 10
    y1 = jax.random.normal(k3, (B2_, L2, IN1b), dtype=jnp.float32)
    y2 = jax.random.normal(k4, (B2_, L2, IN2b), dtype=jnp.float32)
    y1b = jnp.concatenate([y1, jnp.ones_like(y1[..., :1])], axis=-1)
    y2b = jnp.concatenate([y2, jnp.ones_like(y2[..., :1])], axis=-1)
    bound = 1.0 / math.sqrt(IN1b + 1)
    w2 = jax.random.uniform(k_w2, (OUT2, IN1b + 1, IN2b + 1),
                            minval=-bound, maxval=bound, dtype=jnp.float32)

    oe = jax.block_until_ready(bilinear_expand(y1b, w2, y2b, seq_tile_cap=128))
    re_ = jnp.einsum('bxi,oij,byj->boxy', y1b, w2, y2b,
                     precision=jax.lax.Precision.HIGHEST)
    assert oe.shape == (B2_, OUT2, L2, L2)
    assert jnp.allclose(oe, re_, atol=2e-2, rtol=2e-2), (
        float(jnp.max(jnp.abs(oe - re_))))

    on = jax.block_until_ready(bilinear_noexpand(y1b, w2, y2b, seq_tile_cap=128))
    rn_ = jnp.einsum('bli,oij,blj->blo', y1b, w2, y2b,
                     precision=jax.lax.Precision.HIGHEST)
    assert on.shape == (B2_, L2, OUT2)
    assert jnp.allclose(on, rn_, atol=2e-2, rtol=2e-2), (
        float(jnp.max(jnp.abs(on - rn_))))

    print("KERNEL_OK")
</pallas_src>

<mosaic_0001>
module attributes {stable_mosaic.version = 11 : i64} {
  func.func @_bilinear_expand_kernel(%arg0: i32, %arg1: i32, %arg2: i32, %arg3: i32, %arg4: memref<1x8x128xf32, #tpu.memory_space<vmem>>, %arg5: memref<1x128x512xf32, #tpu.memory_space<vmem>>, %arg6: memref<1x128x128xf32, #tpu.memory_space<vmem>>, %arg7: memref<1x4x8x128xf32, #tpu.memory_space<vmem>>, %arg8: memref<8x512xf32, #tpu.memory_space<vmem>>) attributes {dimension_semantics = [#tpu.dimension_semantics<parallel>, #tpu.dimension_semantics<parallel>, #tpu.dimension_semantics<parallel>, #tpu.dimension_semantics<arbitrary>], iteration_bounds = array<i64: 1, 2, 1, 1>, scalar_prefetch = 0 : i64, scratch_operands = 1 : i64, tpu.core_type = #tpu.core_type<tc>, window_params = [{transform_indices = @transform_0, window_bounds = array<i64: 1, 8, 128>}, {transform_indices = @transform_1, window_bounds = array<i64: 1, 128, 512>}, {transform_indices = @transform_2, window_bounds = array<i64: 1, 128, 128>}, {transform_indices = @transform_3, window_bounds = array<i64: 1, 4, 8, 128>}]} {
    %c0_i32 = arith.constant 0 : i32
    %0 = arith.cmpi eq, %arg3, %c0_i32 : i32
    %1 = arith.extui %0 : i1 to i32
    %c0_i32_0 = arith.constant 0 : i32
    %2 = arith.cmpi ne, %1, %c0_i32_0 : i32
    scf.if %2 {
      %c0_24 = arith.constant 0 : index
      %c0_25 = arith.constant 0 : index
      %c0_26 = arith.constant 0 : index
      %25 = vector.load %arg4[%c0_24, %c0_25, %c0_26] : memref<1x8x128xf32, #tpu.memory_space<vmem>>, vector<1x8x128xf32>
      %26 = vector.shape_cast %25 : vector<1x8x128xf32> to vector<8x128xf32>
      %c0_27 = arith.constant 0 : index
      %c0_28 = arith.constant 0 : index
      %c0_29 = arith.constant 0 : index
      %27 = vector.load %arg5[%c0_27, %c0_28, %c0_29] : memref<1x128x512xf32, #tpu.memory_space<vmem>>, vector<1x128x512xf32>
      %28 = vector.shape_cast %27 : vector<1x128x512xf32> to vector<128x512xf32>
      %cst_30 = arith.constant dense<0.000000e+00> : vector<8x512xf32>
      %29 = tpu.matmul %26, %28, %cst_30 {dimension_numbers = #tpu.dot_dimension_numbers<[1], [0], [0], [1], [0, 0, 1, 1], [], []>} : vector<8x128xf32>, vector<128x512xf32>, vector<8x512xf32> -> vector<8x512xf32>
      %c0_31 = arith.constant 0 : index
      %c0_32 = arith.constant 0 : index
      %30 = vector.load %arg8[%c0_31, %c0_32] : memref<8x512xf32, #tpu.memory_space<vmem>>, vector<8x512xf32>
      tpu.vector_store %arg8[%c0_31, %c0_32], %29 {strides = array<i32>} : memref<8x512xf32, #tpu.memory_space<vmem>>, vector<8x512xf32>,
    } else {
    }
    %c0 = arith.constant 0 : index
    %c0_1 = arith.constant 0 : index
    %c0_2 = arith.constant 0 : index
    %3 = vector.load %arg6[%c0, %c0_1, %c0_2] : memref<1x128x128xf32, #tpu.memory_space<vmem>>, vector<1x128x128xf32>
    %4 = vector.shape_cast %3 : vector<1x128x128xf32> to vector<128x128xf32>
    %c0_3 = arith.constant 0 : index
    %c0_4 = arith.constant 0 : index
    %5 = vector.load %arg8[%c0_3, %c0_4] : memref<8x512xf32, #tpu.memory_space<vmem>>, vector<8x128xf32>
    %cst = arith.constant dense<0.000000e+00> : vector<8x128xf32>
    %6 = tpu.matmul %5, %4, %cst {dimension_numbers = #tpu.dot_dimension_numbers<[1], [1], [0], [0], [0, 0, 1, 0], [], []>} : vector<8x128xf32>, vector<128x128xf32>, vector<8x128xf32> -> vector<8x128xf32>
    %c0_5 = arith.constant 0 : index
    %c0_6 = arith.constant 0 : index
    %c0_7 = arith.constant 0 : index
    %c0_8 = arith.constant 0 : index
    %7 = vector.load %arg7[%c0_5, %c0_6, %c0_7, %c0_8] : memref<1x4x8x128xf32, #tpu.memory_space<vmem>>, vector<1x1x8x128xf32>
    %8 = vector.shape_cast %7 : vector<1x1x8x128xf32> to vector<8x128xf32>
    %9 = vector.shape_cast %6 : vector<8x128xf32> to vector<1x1x8x128xf32>
    tpu.vector_store %arg7[%c0_5, %c0_6, %c0_7, %c0_8], %9 {strides = array<i32>} : memref<1x4x8x128xf32, #tpu.memory_space<vmem>>, vector<1x1x8x128xf32>,
    %c0_9 = arith.constant 0 : index
    %c128 = arith.constant 128 : index
    %10 = vector.load %arg8[%c0_9, %c128] : memref<8x512xf32, #tpu.memory_space<vmem>>, vector<8x128xf32>
    %cst_10 = arith.constant dense<0.000000e+00> : vector<8x128xf32>
    %11 = tpu.matmul %10, %4, %cst_10 {dimension_numbers = #tpu.dot_dimension_numbers<[1], [1], [0], [0], [0, 0, 1, 0], [], []>} : vector<8x128xf32>, vector<128x128xf32>, vector<8x128xf32> -> vector<8x128xf32>
    %c0_11 = arith.constant 0 : index
    %c1 = arith.constant 1 : index
    %c0_12 = arith.constant 0 : index
    %c0_13 = arith.constant 0 : index
    %12 = vector.load %arg7[%c0_11, %c1, %c0_12, %c0_13] : memref<1x4x8x128xf32, #tpu.memory_space<vmem>>, vector<1x1x8x128xf32>
    %13 = vector.shape_cast %12 : vector<1x1x8x128xf32> to vector<8x128xf32>
    %14 = vector.shape_cast %11 : vector<8x128xf32> to vector<1x1x8x128xf32>
    tpu.vector_store %arg7[%c0_11, %c1, %c0_12, %c0_13], %14 {strides = array<i32>} : memref<1x4x8x128xf32, #tpu.memory_space<vmem>>, vector<1x1x8x128xf32>,
    %c0_14 = arith.constant 0 : index
    %c256 = arith.constant 256 : index
    %15 = vector.load %arg8[%c0_14, %c256] : memref<8x512xf32, #tpu.memory_space<vmem>>, vector<8x128xf32>
    %cst_15 = arith.constant dense<0.000000e+00> : vector<8x128xf32>
    %16 = tpu.matmul %15, %4, %cst_15 {dimension_numbers = #tpu.dot_dimension_numbers<[1], [1], [0], [0], [0, 0, 1, 0], [], []>} : vector<8x128xf32>, vector<128x128xf32>, vector<8x128xf32> -> vector<8x128xf32>
    %c0_16 = arith.constant 0 : index
    %c2 = arith.constant 2 : index
    %c0_17 = arith.constant 0 : index
    %c0_18 = arith.constant 0 : index
    %17 = vector.load %arg7[%c0_16, %c2, %c0_17, %c0_18] : memref<1x4x8x128xf32, #tpu.memory_space<vmem>>, vector<1x1x8x128xf32>
    %18 = vector.shape_cast %17 : vector<1x1x8x128xf32> to vector<8x128xf32>
    %19 = vector.shape_cast %16 : vector<8x128xf32> to vector<1x1x8x128xf32>
    tpu.vector_store %arg7[%c0_16, %c2, %c0_17, %c0_18], %19 {strides = array<i32>} : memref<1x4x8x128xf32, #tpu.memory_space<vmem>>, vector<1x1x8x128xf32>,
    %c0_19 = arith.constant 0 : index
    %c384 = arith.constant 384 : index
    %20 = vector.load %arg8[%c0_19, %c384] : memref<8x512xf32, #tpu.memory_space<vmem>>, vector<8x128xf32>
    %cst_20 = arith.constant dense<0.000000e+00> : vector<8x128xf32>
    %21 = tpu.matmul %20, %4, %cst_20 {dimension_numbers = #tpu.dot_dimension_numbers<[1], [1], [0], [0], [0, 0, 1, 0], [], []>} : vector<8x128xf32>, vector<128x128xf32>, vector<8x128xf32> -> vector<8x128xf32>
    %c0_21 = arith.constant 0 : index
    %c3 = arith.constant 3 : index
    %c0_22 = arith.constant 0 : index
    %c0_23 = arith.constant 0 : index
    %22 = vector.load %arg7[%c0_21, %c3, %c0_22, %c0_23] : memref<1x4x8x128xf32, #tpu.memory_space<vmem>>, vector<1x1x8x128xf32>
    %23 = vector.shape_cast %22 : vector<1x1x8x128xf32> to vector<8x128xf32>
    %24 = vector.shape_cast %21 : vector<8x128xf32> to vector<1x1x8x128xf32>
    tpu.vector_store %arg7[%c0_21, %c3, %c0_22, %c0_23], %24 {strides = array<i32>} : memref<1x4x8x128xf32, #tpu.memory_space<vmem>>, vector<1x1x8x128xf32>,
    return
  }
  func.func @transform_0(%arg0: i32, %arg1: i32, %arg2: i32, %arg3: i32) -> (i32, i32, i32) {
    %c0_i32 = arith.constant 0 : i32
    %c0_i32_0 = arith.constant 0 : i32
    return %arg1, %arg2, %c0_i32 : i32, i32, i32
  }
  func.func @transform_1(%arg0: i32, %arg1: i32, %arg2: i32, %arg3: i32) -> (i32, i32, i32) {
    %c0_i32 = arith.constant 0 : i32
    %c0_i32_0 = arith.constant 0 : i32
    %c0_i32_1 = arith.constant 0 : i32
    return %arg0, %c0_i32, %c0_i32_0 : i32, i32, i32
  }
  func.func @transform_2(%arg0: i32, %arg1: i32, %arg2: i32, %arg3: i32) -> (i32, i32, i32) {
    %c0_i32 = arith.constant 0 : i32
    %c0_i32_0 = arith.constant 0 : i32
    return %arg1, %arg3, %c0_i32 : i32, i32, i32
  }
  func.func @transform_3(%arg0: i32, %arg1: i32, %arg2: i32, %arg3: i32) -> (i32, i32, i32, i32) {
    %c0_i32 = arith.constant 0 : i32
    return %arg1, %arg0, %arg2, %arg3 : i32, i32, i32, i32
  }
}

</mosaic_0001>

<llo_original>
// kernel: tpu_custom_call.1
$region0: #{tpu_custom_call.1}
  #allocation0 [shape = 'u32[]', space=smem, size = 0x4, offset = 0x4, fixed_abs, tag = 'smem constant byte address 0x4 - core index']
  #allocation1 [shape = 'u32[72,128]{1,0:T(1,128)}', space=vmem, size = 0x9000, scoped, tag = 'internal scratch']
  #allocation2 [shape = 'f32[8,512]{1,0:T(8,128)}', space=vmem, size = 0x4000, scoped, tag = 'scratch operand']
  %s0 = inlined_call_operand.hbm [shape: f32[2,8,128], index: 0, kind: input, shape index: {}]
  %s1 = inlined_call_operand.hbm [shape: f32[1,128,512], index: 1, kind: input, shape index: {}]
  %s2 = inlined_call_operand.hbm [shape: f32[2,128,128], index: 2, kind: input, shape index: {}]
  %s3 = inlined_call_operand.hbm [shape: f32[2,4,8,128], index: 3, kind: output, shape index: {}]
  %s4 = sld [smem:[#allocation0]]
  $region61: #{tpu_custom_call.1} parent=0
    _
  %s6 = ssub.s32 1, %s4
  %s7 = scalar_select 0, %s6, %s4
  $region1: #{tpu_custom_call.1} parent=0
    #allocation3 [shape = 'u8[8192]{0}', space=vmem, size = 0x2000, scoped, tag = 'input window, operand 0']
    #allocation4 [shape = 's32[2]{0}', space=sflag, size = 0x8, scoped, tag = 'scoped memory for tpu_custom_call.1']
    #allocation5 [shape = 's32[2]{0}', space=sflag, size = 0x8, scoped, tag = 'scoped memory for tpu_custom_call.1']
    #allocation6 [shape = 'u8[262144]{0}', space=vmem, size = 0x40000, scoped, tag = 'input window, operand 1, single buffered']
    #allocation7 [shape = 's32[1]{0}', space=sflag, size = 0x4, scoped, tag = 'scoped memory for tpu_custom_call.1']
    #allocation8 [shape = 'u8[131072]{0}', space=vmem, size = 0x20000, scoped, tag = 'input window, operand 2']
    #allocation9 [shape = 'u8[32768]{0}', space=vmem, size = 0x8000, scoped, tag = 'output window, operand 0']
    %8 = vsyncpa [#allocation4], 0
    %s9 = scalar_lea.sflag [#allocation4], 1
    %10 = vsyncpa %s9, 0
    %11 = vsyncpa [#allocation7], 0
    %12 = vsyncpa [#allocation5], 0
    %s13 = scalar_lea.sflag [#allocation5], 1
    %14 = vsyncpa %s13, 0
    loop: start=0, step=1, limit=4
    $region2: #{tpu_custom_call.1} parent=1 // loop_pre_header
      _
    $region3: #{tpu_custom_call.1} parent=1 // loop_header
      %s16 = sphi 0, %s20
      %p17 = scmp.ge.s32.totalorder %s16, 4
      %s23 = sphi 0, %s49
      %s24 = sphi 0, %s45
      %s25 = sphi 0, %s41
      %s26 = sphi 0, %s37
      %s27 = sphi 0, %s23
      %s28 = sphi 0, %s24
      %s29 = sphi 0, %s25
      %s30 = sphi 0, %s26
      %s31 = sphi 0, %s27
      %s32 = sphi 0, %s28
      %s33 = sphi 0, %s29
      %s34 = sphi 0, %s30
      %s54 = sphi 0, %s56
      %s57 = sphi 0, %s54
      %s58 = sphi 0, %s57
      %s74 = sphi 0, %s58
      %s80 = sphi 0, %s82
      %s83 = sphi 0, %s80
      %s84 = sphi 0, %s83
      %s100 = sphi 0, %s84
      %s108 = sphi 0, %s110
      %s111 = sphi 0, %s108
      %s112 = sphi 0, %s111
      %s128 = sphi 0, %s112
      %s140 = sphi 0, %s142
      %s143 = sphi 0, %s140
      %s144 = sphi 0, %s143
      %s160 = sphi 0, %s144
    $region4: #{tpu_custom_call.1} parent=1 // loop_header_branch
      %19 = sbr.rel (%p17) target = $region8
    $region5: #{tpu_custom_call.1} parent=1 // loop_body
      %s21 = ssub.s32 %s16, 1
      %s22 = ssub.s32 %s16, 2
      %s35 = sadd.s32 1, %s26
      %p36 = scmp.ge.s32.totalorder %s35, 1
      %s37 = scalar_select %p36, 0, %s35
      %s38 = sadd.s32 1, %s25
      %s39 = scalar_select %p36, %s38, %s25
      %p40 = scmp.ge.s32.totalorder %s39, 1
      %s41 = scalar_select %p40, 0, %s39
      %s42 = sadd.s32 1, %s24
      %s43 = scalar_select %p40, %s42, %s24
      %p44 = scmp.ge.s32.totalorder %s43, 2
      %s45 = scalar_select %p44, 0, %s43
      %s46 = sadd.s32 1, %s23
      %s47 = scalar_select %p44, %s46, %s23
      %p48 = scmp.ge.s32.totalorder %s47, 1
      %s49 = scalar_select %p48, 0, %s47
      %s50 = ssub.s32 %s24, %s45
      %s51 = ssub.s32 %s25, %s41
      %s52 = sor.u32 %s50, %s51
      %p53 = scmp.eq.s32.totalorder %s52, 0
      %s55 = sadd.s32 %s54, 1
      %s56 = scalar_select %p53, %s54, %s55
      %p59 = pneg %p53
      %p60 = scmp.eq.s32.totalorder %s16, 1
      %p61 = por %p59, %p60
      %p62 = scmp.ne.s32.totalorder %s54, %s57
      %p63 = scmp.eq.s32.totalorder %s16, 0
      %p64 = por %p62, %p63
      %p65 = scmp.ne.s32.totalorder %s54, %s57
      %p66 = scmp.eq.s32.totalorder %s21, 1
      %p67 = por %p65, %p66
      %p68 = scmp.ne.s32.totalorder %s57, %s58
      %p69 = scmp.eq.s32.totalorder %s21, 0
      %p70 = por %p68, %p69
      %p71 = scmp.ne.s32.totalorder %s57, %s58
      %p72 = scmp.eq.s32.totalorder %s22, 1
      %p73 = por %p71, %p72
      %p75 = scmp.ne.s32.totalorder %s58, %s74
      %p76 = scmp.eq.s32.totalorder %s22, 0
      %p77 = por %p75, %p76
      %s78 = ssub.s32 %s23, %s49
      %p79 = scmp.eq.s32.totalorder %s78, 0
      %s81 = sadd.s32 %s80, 1
      %s82 = scalar_select %p79, %s80, %s81
      %p85 = pneg %p79
      %p86 = scmp.eq.s32.totalorder %s16, 1
      %p87 = por %p85, %p86
      %p88 = scmp.ne.s32.totalorder %s80, %s83
      %p89 = scmp.eq.s32.totalorder %s16, 0
      %p90 = por %p88, %p89
      %p91 = scmp.ne.s32.totalorder %s80, %s83
      %p92 = scmp.eq.s32.totalorder %s21, 1
      %p93 = por %p91, %p92
      %p94 = scmp.ne.s32.totalorder %s83, %s84
      %p95 = scmp.eq.s32.totalorder %s21, 0
      %p96 = por %p94, %p95
      %p97 = scmp.ne.s32.totalorder %s83, %s84
      %p98 = scmp.eq.s32.totalorder %s22, 1
      %p99 = por %p97, %p98
      %p101 = scmp.ne.s32.totalorder %s84, %s100
      %p102 = scmp.eq.s32.totalorder %s22, 0
      %p103 = por %p101, %p102
      %s104 = ssub.s32 %s24, %s45
      %s105 = ssub.s32 %s26, %s37
      %s106 = sor.u32 %s104, %s105
      %p107 = scmp.eq.s32.totalorder %s106, 0
      %s109 = sadd.s32 %s108, 1
      %s110 = scalar_select %p107, %s108, %s109
      %p113 = pneg %p107
      %p114 = scmp.eq.s32.totalorder %s16, 1
      %p115 = por %p113, %p114
      %p116 = scmp.ne.s32.totalorder %s108, %s111
      %p117 = scmp.eq.s32.totalorder %s16, 0
      %p118 = por %p116, %p117
      %p119 = scmp.ne.s32.totalorder %s108, %s111
      %p120 = scmp.eq.s32.totalorder %s21, 1
      %p121 = por %p119, %p120
      %p122 = scmp.ne.s32.totalorder %s111, %s112
      %p123 = scmp.eq.s32.totalorder %s21, 0
      %p124 = por %p122, %p123
      %p125 = scmp.ne.s32.totalorder %s111, %s112
      %p126 = scmp.eq.s32.totalorder %s22, 1
      %p127 = por %p125, %p126
      %p129 = scmp.ne.s32.totalorder %s112, %s128
      %p130 = scmp.eq.s32.totalorder %s22, 0
      %p131 = por %p129, %p130
      %s132 = ssub.s32 %s24, %s45
      %s133 = ssub.s32 %s23, %s49
      %s134 = sor.u32 %s132, %s133
      %s135 = ssub.s32 %s25, %s41
      %s136 = sor.u32 %s134, %s135
      %s137 = ssub.s32 %s26, %s37
      %s138 = sor.u32 %s136, %s137
      %p139 = scmp.eq.s32.totalorder %s138, 0
      %s141 = sadd.s32 %s140, 1
      %s142 = scalar_select %p139, %s140, %s141
      %p145 = pneg %p139
      %p146 = scmp.eq.s32.totalorder %s16, 1
      %p147 = por %p145, %p146
      %p148 = scmp.ne.s32.totalorder %s140, %s143
      %p149 = scmp.eq.s32.totalorder %s16, 0
      %p150 = por %p148, %p149
      %p151 = scmp.ne.s32.totalorder %s140, %s143
      %p152 = scmp.eq.s32.totalorder %s21, 1
      %p153 = por %p151, %p152
      %p154 = scmp.ne.s32.totalorder %s143, %s144
      %p155 = scmp.eq.s32.totalorder %s21, 0
      %p156 = por %p154, %p155
      %p157 = scmp.ne.s32.totalorder %s143, %s144
      %p158 = scmp.eq.s32.totalorder %s22, 1
      %p159 = por %p157, %p158
      %p161 = scmp.ne.s32.totalorder %s144, %s160
      %p162 = scmp.eq.s32.totalorder %s22, 0
      %p163 = por %p161, %p162
      %p164 = scmp.le.s32.totalorder 1, %s16
      %p165 = scmp.lt.s32.totalorder %s16, 3
      %p166 = pnand %p164, %p165
      %p167 = pneg %p166
      // Predicated region
      $region9: #{tpu_custom_call.1} parent=5 // pred_check
        _
      $region10: #{tpu_custom_call.1} parent=5 // pred_check_branch
        %169 = sbr.rel (%p166) target = $region12
      $region11: #{tpu_custom_call.1} parent=5 // pred_region
        %s170 = ssub.s32 %s16, 1
        // Predicated region
        $region13: #{tpu_custom_call.1} parent=11 // pred_check
          %p171 = pneg %p96
        $region14: #{tpu_custom_call.1} parent=11 // pred_check_branch
          %173 = sbr.rel (%p171) target = $region16
        $region15: #{tpu_custom_call.1} parent=11 // pred_region
          %175 = vsyncadd [#allocation7], 0
          %s176 = smul.addr %s27, 64
          %s177 = smul.addr %s176, 8
          %s178 = scalar_lea.hbm %s1, %s177
          %s179 = sshll.u32 %s178, 4
          %s180 = int_to_ptr.hbm [resolvable:$true] %s179
          %s181 = sshll.u32 [#allocation6], 4
          %s182 = int_to_ptr.vmem [resolvable:$true] %s181
          %187 = dma.hbm_to_vmem [thread:$0]  %s180, 8192, %s182, [#allocation7], 512, 512, 32
        $region16: #{tpu_custom_call.1} parent=11 // pred_fallthru
          _
      $region12: #{tpu_custom_call.1} parent=5 // pred_fallthru
        _
      %p188 = scmp.lt.s32.totalorder %s16, 2
      // Predicated region
      $region17: #{tpu_custom_call.1} parent=5 // pred_check
        %p189 = pneg %p188
      $region18: #{tpu_custom_call.1} parent=5 // pred_check_branch
        %191 = sbr.rel (%p189) target = $region20
      $region19: #{tpu_custom_call.1} parent=5 // pred_region
        // Predicated region
        $region21: #{tpu_custom_call.1} parent=19 // pred_check
          %p192 = pneg %p64
        $region22: #{tpu_custom_call.1} parent=19 // pred_check_branch
          %194 = sbr.rel (%p192) target = $region24
        $region23: #{tpu_custom_call.1} parent=19 // pred_region
          %s195 = sand.u32 %s16, 1
          %s196 = scalar_lea.sflag [#allocation4], %s195
          %s197 = sand.u32 %s54, 1
          %s198 = smul.addr %s197, 8
          %s199 = scalar_lea.vmem [#allocation3], %s198
          %201 = vsyncadd %s196, 0
          %s202 = sadd.s32 %s25, %s24
          %s203 = smul.addr %s202, 8
          %s204 = scalar_lea.hbm %s0, %s203
          %s206 = sshll.u32 %s204, 4
          %s207 = int_to_ptr.hbm [resolvable:$true] %s206
          %s208 = sshll.u32 %s199, 4
          %s209 = int_to_ptr.vmem [resolvable:$true] %s208
          %211 = dma.hbm_to_vmem [thread:$0]  %s207, 128, %s209, %s196
        $region24: #{tpu_custom_call.1} parent=19 // pred_fallthru
          _
        // Predicated region
        $region25: #{tpu_custom_call.1} parent=19 // pred_check
          %p212 = pneg %p118
        $region26: #{tpu_custom_call.1} parent=19 // pred_check_branch
          %214 = sbr.rel (%p212) target = $region28
        $region27: #{tpu_custom_call.1} parent=19 // pred_region
          %s215 = sand.u32 %s16, 1
          %s216 = scalar_lea.sflag [#allocation4], %s215
          %s217 = sand.u32 %s108, 1
          %s218 = smul.addr %s217, 128
          %s219 = scalar_lea.vmem [#allocation8], %s218
          %s220 = smul.u32 16, %s26
          %222 = vsyncadd %s216, 0
          %s223 = smul.addr %s24, 16
          %s224 = sadd.s32 %s220, %s223
          %s225 = smul.addr %s224, 8
          %s226 = scalar_lea.hbm %s2, %s225
          %s227 = sshll.u32 %s226, 4
          %s228 = int_to_ptr.hbm [resolvable:$true] %s227
          %s229 = sshll.u32 %s219, 4
          %s230 = int_to_ptr.vmem [resolvable:$true] %s229
          %235 = dma.hbm_to_vmem [thread:$0]  %s228, 2048, %s230, %s216, 128, 128, 8
        $region28: #{tpu_custom_call.1} parent=19 // pred_fallthru
          _
      $region20: #{tpu_custom_call.1} parent=5 // pred_fallthru
        _
      %p236 = scmp.le.s32.totalorder 1, %s16
      %p237 = scmp.lt.s32.totalorder %s16, 3
      %p238 = pnand %p236, %p237
      %p239 = pneg %p238
      // Predicated region
      $region29: #{tpu_custom_call.1} parent=5 // pred_check
        _
      $region30: #{tpu_custom_call.1} parent=5 // pred_check_branch
        %241 = sbr.rel (%p238) target = $region32
      $region31: #{tpu_custom_call.1} parent=5 // pred_region
        %s242 = ssub.s32 %s16, 1
        %s243 = sand.u32 %s21, 1
        %s244 = scalar_lea.sflag [#allocation4], %s243
        %s245 = sand.u32 %s57, 1
        %s246 = smul.addr %s245, 8
        %s247 = scalar_lea.vmem [#allocation3], %s246
        // Predicated region
        $region33: #{tpu_custom_call.1} parent=31 // pred_check
          %p248 = pneg %p70
        $region34: #{tpu_custom_call.1} parent=31 // pred_check_branch
          %250 = sbr.rel (%p248) target = $region36
        $region35: #{tpu_custom_call.1} parent=31 // pred_region
          %252 = dma.done %s244, 128
        $region36: #{tpu_custom_call.1} parent=31 // pred_fallthru
          _
        // Predicated region
        $region37: #{tpu_custom_call.1} parent=31 // pred_check
          %p253 = pneg %p96
        $region38: #{tpu_custom_call.1} parent=31 // pred_check_branch
          %255 = sbr.rel (%p253) target = $region40
        $region39: #{tpu_custom_call.1} parent=31 // pred_region
          %257 = dma.done [#allocation7], 8192
        $region40: #{tpu_custom_call.1} parent=31 // pred_fallthru
          _
        %s258 = sand.u32 %s21, 1
        %s259 = scalar_lea.sflag [#allocation4], %s258
        %s260 = sand.u32 %s111, 1
        %s261 = smul.addr %s260, 128
        %s262 = scalar_lea.vmem [#allocation8], %s261
        // Predicated region
        $region41: #{tpu_custom_call.1} parent=31 // pred_check
          %p263 = pneg %p124
        $region42: #{tpu_custom_call.1} parent=31 // pred_check_branch
          %265 = sbr.rel (%p263) target = $region44
        $region43: #{tpu_custom_call.1} parent=31 // pred_region
          %267 = dma.done %s259, 2048
        $region44: #{tpu_custom_call.1} parent=31 // pred_fallthru
          _
        %s268 = sand.u32 %s21, 1
        %s269 = scalar_lea.sflag [#allocation4], %s268
        %s270 = sand.u32 %s57, 1
        %s271 = smul.addr %s270, 8
        %s272 = scalar_lea.vmem [#allocation3], %s271
        %p273 = pneg %p70
        %p274 = pneg %p67
        %p275 = pneg %p96
        %p276 = pneg %p93
        %s277 = sand.u32 %s21, 1
        %s278 = scalar_lea.sflag [#allocation4], %s277
        %s279 = sand.u32 %s111, 1
        %s280 = smul.addr %s279, 128
        %s281 = scalar_lea.vmem [#allocation8], %s280
        %p282 = pneg %p124
        %p283 = pneg %p121
        %p284 = pneg %p156
        %p285 = pneg %p153
        %s286 = sand.u32 %s143, 1
        %s287 = scalar_lea.sflag [#allocation5], %s286
        %s288 = sand.u32 %s143, 1
        %s289 = smul.addr %s288, 32
        %s290 = scalar_lea.vmem [#allocation9], %s289
        %s291 = smul.u32 16, %s30
        %s292 = smul.u32 4, %s27
        %p293 = scmp.eq.s32.totalorder %s30, 0
        // Predicated region
        $region45: #{tpu_custom_call.1} parent=31 // pred_check
          %p294 = pneg %p293
        $region46: #{tpu_custom_call.1} parent=31 // pred_check_branch
          %296 = sbr.rel (%p294) target = $region48
        $region47: #{tpu_custom_call.1} parent=31 // pred_region
          %v297 = vld [vmem:[%s247] sm:$0xff]
          %v298 = vld [vmem:[#allocation6] sm:$0xff]
          %v299 = vld [vmem:[#allocation6 + $0x8] sm:$0xff]
          %v300 = vld [vmem:[#allocation6 + $0x10] sm:$0xff]
          %v301 = vld [vmem:[#allocation6 + $0x18] sm:$0xff]
          %v302 = vld [vmem:[#allocation6 + $0x20] sm:$0xff]
          %v303 = vld [vmem:[#allocation6 + $0x28] sm:$0xff]
          %v304 = vld [vmem:[#allocation6 + $0x30] sm:$0xff]
          %v305 = vld [vmem:[#allocation6 + $0x38] sm:$0xff]
          %v306 = vld [vmem:[#allocation6 + $0x40] sm:$0xff]
          %v307 = vld [vmem:[#allocation6 + $0x48] sm:$0xff]
          %v308 = vld [vmem:[#allocation6 + $0x50] sm:$0xff]
          %v309 = vld [vmem:[#allocation6 + $0x58] sm:$0xff]
          %v310 = vld [vmem:[#allocation6 + $0x60] sm:$0xff]
          %v311 = vld [vmem:[#allocation6 + $0x68] sm:$0xff]
          %v312 = vld [vmem:[#allocation6 + $0x70] sm:$0xff]
          %v313 = vld [vmem:[#allocation6 + $0x78] sm:$0xff]
          %v314 = vld [vmem:[#allocation6 + $0x80] sm:$0xff]
          %v315 = vld [vmem:[#allocation6 + $0x88] sm:$0xff]
          %v316 = vld [vmem:[#allocation6 + $0x90] sm:$0xff]
          %v317 = vld [vmem:[#allocation6 + $0x98] sm:$0xff]
          %v318 = vld [vmem:[#allocation6 + $0xa0] sm:$0xff]
          %v319 = vld [vmem:[#allocation6 + $0xa8] sm:$0xff]
          %v320 = vld [vmem:[#allocation6 + $0xb0] sm:$0xff]
          %v321 = vld [vmem:[#allocation6 + $0xb8] sm:$0xff]
          %v322 = vld [vmem:[#allocation6 + $0xc0] sm:$0xff]
          %v323 = vld [vmem:[#allocation6 + $0xc8] sm:$0xff]
          %v324 = vld [vmem:[#allocation6 + $0xd0] sm:$0xff]
          %v325 = vld [vmem:[#allocation6 + $0xd8] sm:$0xff]
          %v326 = vld [vmem:[#allocation6 + $0xe0] sm:$0xff]
          %v327 = vld [vmem:[#allocation6 + $0xe8] sm:$0xff]
          %v328 = vld [vmem:[#allocation6 + $0xf0] sm:$0xff]
          %v329 = vld [vmem:[#allocation6 + $0xf8] sm:$0xff]
          %v330 = vld [vmem:[#allocation6 + $0x100] sm:$0xff]
          %v331 = vld [vmem:[#allocation6 + $0x108] sm:$0xff]
          %v332 = vld [vmem:[#allocation6 + $0x110] sm:$0xff]
          %v333 = vld [vmem:[#allocation6 + $0x118] sm:$0xff]
          %v334 = vld [vmem:[#allocation6 + $0x120] sm:$0xff]
          %v335 = vld [vmem:[#allocation6 + $0x128] sm:$0xff]
          %v336 = vld [vmem:[#allocation6 + $0x130] sm:$0xff]
          %v337 = vld [vmem:[#allocation6 + $0x138] sm:$0xff]
          %v338 = vld [vmem:[#allocation6 + $0x140] sm:$0xff]
          %v339 = vld [vmem:[#allocation6 + $0x148] sm:$0xff]
          %v340 = vld [vmem:[#allocation6 + $0x150] sm:$0xff]
          %v341 = vld [vmem:[#allocation6 + $0x158] sm:$0xff]
          %v342 = vld [vmem:[#allocation6 + $0x160] sm:$0xff]
          %v343 = vld [vmem:[#allocation6 + $0x168] sm:$0xff]
          %v344 = vld [vmem:[#allocation6 + $0x170] sm:$0xff]
          %v345 = vld [vmem:[#allocation6 + $0x178] sm:$0xff]
          %v346 = vld [vmem:[#allocation6 + $0x180] sm:$0xff]
          %v347 = vld [vmem:[#allocation6 + $0x188] sm:$0xff]
          %v348 = vld [vmem:[#allocation6 + $0x190] sm:$0xff]
          %v349 = vld [vmem:[#allocation6 + $0x198] sm:$0xff]
          %v350 = vld [vmem:[#allocation6 + $0x1a0] sm:$0xff]
          %v351 = vld [vmem:[#allocation6 + $0x1a8] sm:$0xff]
          %v352 = vld [vmem:[#allocation6 + $0x1b0] sm:$0xff]
          %v353 = vld [vmem:[#allocation6 + $0x1b8] sm:$0xff]
          %v354 = vld [vmem:[#allocation6 + $0x1c0] sm:$0xff]
          %v355 = vld [vmem:[#allocation6 + $0x1c8] sm:$0xff]
          %v356 = vld [vmem:[#allocation6 + $0x1d0] sm:$0xff]
          %v357 = vld [vmem:[#allocation6 + $0x1d8] sm:$0xff]
          %v358 = vld [vmem:[#allocation6 + $0x1e0] sm:$0xff]
          %v359 = vld [vmem:[#allocation6 + $0x1e8] sm:$0xff]
          %v360 = vld [vmem:[#allocation6 + $0x1f0] sm:$0xff]
          %v361 = vld [vmem:[#allocation6 + $0x1f8] sm:$0xff]
          %362 = vmatpush.msra.mxu0 %v358
          %363 = vmatpush.msra.mxu0 %v354
          %364 = vmatpush.msra.mxu0 %v350
          %365 = vmatpush.msra.mxu0 %v346
          %366 = vmatpush.msra.mxu0 %v342
          %367 = vmatpush.msra.mxu0 %v338
          %368 = vmatpush.msra.mxu0 %v334
          %369 = vmatpush.msra.mxu0 %v330
          %370 = vmatpush.msra.mxu0 %v326
          %371 = vmatpush.msra.mxu0 %v322
          %372 = vmatpush.msra.mxu0 %v318
          %373 = vmatpush.msra.mxu0 %v314
          %374 = vmatpush.msra.mxu0 %v310
          %375 = vmatpush.msra.mxu0 %v306
          %376 = vmatpush.msra.mxu0 %v302
          %377 = vmatpush.msra.mxu0 %v298
          %378 = vmatmul.f32.gmra.mxu0 %v297
          %v379 = vpop.f32.mrf.mxu0
          %v380 = vadd.f32 0.0, %v379
          %381 = vdwg.mxu0
          %382 = vmatpush.msra.mxu0 %v359
          %383 = vmatpush.msra.mxu0 %v355
          %384 = vmatpush.msra.mxu0 %v351
          %385 = vmatpush.msra.mxu0 %v347
          %386 = vmatpush.msra.mxu0 %v343
          %387 = vmatpush.msra.mxu0 %v339
          %388 = vmatpush.msra.mxu0 %v335
          %389 = vmatpush.msra.mxu0 %v331
          %390 = vmatpush.msra.mxu0 %v327
          %391 = vmatpush.msra.mxu0 %v323
          %392 = vmatpush.msra.mxu0 %v319
          %393 = vmatpush.msra.mxu0 %v315
          %394 = vmatpush.msra.mxu0 %v311
          %395 = vmatpush.msra.mxu0 %v307
          %396 = vmatpush.msra.mxu0 %v303
          %397 = vmatpush.msra.mxu0 %v299
          %398 = vmatmul.f32.gmra.mxu0 %v297
          %v399 = vpop.f32.mrf.mxu0
          %v400 = vadd.f32 0.0, %v399
          %401 = vdwg.mxu0
          %402 = vmatpush.msra.mxu0 %v360
          %403 = vmatpush.msra.mxu0 %v356
          %404 = vmatpush.msra.mxu0 %v352
          %405 = vmatpush.msra.mxu0 %v348
          %406 = vmatpush.msra.mxu0 %v344
          %407 = vmatpush.msra.mxu0 %v340
          %408 = vmatpush.msra.mxu0 %v336
          %409 = vmatpush.msra.mxu0 %v332
          %410 = vmatpush.msra.mxu0 %v328
          %411 = vmatpush.msra.mxu0 %v324
          %412 = vmatpush.msra.mxu0 %v320
          %413 = vmatpush.msra.mxu0 %v316
          %414 = vmatpush.msra.mxu0 %v312
          %415 = vmatpush.msra.mxu0 %v308
          %416 = vmatpush.msra.mxu0 %v304
          %417 = vmatpush.msra.mxu0 %v300
          %418 = vmatmul.f32.gmra.mxu0 %v297
          %v419 = vpop.f32.mrf.mxu0
          %v420 = vadd.f32 0.0, %v419
          %421 = vdwg.mxu0
          %422 = vmatpush.msra.mxu0 %v361
          %423 = vmatpush.msra.mxu0 %v357
          %424 = vmatpush.msra.mxu0 %v353
          %425 = vmatpush.msra.mxu0 %v349
          %426 = vmatpush.msra.mxu0 %v345
          %427 = vmatpush.msra.mxu0 %v341
          %428 = vmatpush.msra.mxu0 %v337
          %429 = vmatpush.msra.mxu0 %v333
          %430 = vmatpush.msra.mxu0 %v329
          %431 = vmatpush.msra.mxu0 %v325
          %432 = vmatpush.msra.mxu0 %v321
          %433 = vmatpush.msra.mxu0 %v317
          %434 = vmatpush.msra.mxu0 %v313
          %435 = vmatpush.msra.mxu0 %v309
          %436 = vmatpush.msra.mxu0 %v305
          %437 = vmatpush.msra.mxu0 %v301
          %438 = vmatmul.f32.gmra.mxu0 %v297
          %v439 = vpop.f32.mrf.mxu0
          %v440 = vadd.f32 0.0, %v439
          %441 = vdwg.mxu0
          %442 = vst [vmem:[#allocation2] sm:$0xff] %v380
          %443 = vst [vmem:[#allocation2 + $0x8] sm:$0xff] %v400
          %444 = vst [vmem:[#allocation2 + $0x10] sm:$0xff] %v420
          %445 = vst [vmem:[#allocation2 + $0x18] sm:$0xff] %v440
        $region48: #{tpu_custom_call.1} parent=31 // pred_fallthru
          _
        %v446 = vld [vmem:[%s262] sm:$0xff]
        %v447 = vld [vmem:[%s262 + $0x8] sm:$0xff]
        %v448 = vld [vmem:[%s262 + $0x10] sm:$0xff]
        %v449 = vld [vmem:[%s262 + $0x18] sm:$0xff]
        %v450 = vld [vmem:[%s262 + $0x20] sm:$0xff]
        %v451 = vld [vmem:[%s262 + $0x28] sm:$0xff]
        %v452 = vld [vmem:[%s262 + $0x30] sm:$0xff]
        %v453 = vld [vmem:[%s262 + $0x38] sm:$0xff]
        %v454 = vld [vmem:[%s262 + $0x40] sm:$0xff]
        %v455 = vld [vmem:[%s262 + $0x48] sm:$0xff]
        %v456 = vld [vmem:[%s262 + $0x50] sm:$0xff]
        %v457 = vld [vmem:[%s262 + $0x58] sm:$0xff]
        %v458 = vld [vmem:[%s262 + $0x60] sm:$0xff]
        %v459 = vld [vmem:[%s262 + $0x68] sm:$0xff]
        %v460 = vld [vmem:[%s262 + $0x70] sm:$0xff]
        %v461 = vld [vmem:[%s262 + $0x78] sm:$0xff]
        %v462 = vld [vmem:[#allocation2] sm:$0xff]
        %463 = vmatpush.xpose.msra.mxu0 %v461
        %464 = vmatpush.xpose.msra.mxu0 %v460
        %465 = vmatpush.xpose.msra.mxu0 %v459
        %466 = vmatpush.xpose.msra.mxu0 %v458
        %467 = vmatpush.xpose.msra.mxu0 %v457
        %468 = vmatpush.xpose.msra.mxu0 %v456
        %469 = vmatpush.xpose.msra.mxu0 %v455
        %470 = vmatpush.xpose.msra.mxu0 %v454
        %471 = vmatpush.xpose.msra.mxu0 %v453
        %472 = vmatpush.xpose.msra.mxu0 %v452
        %473 = vmatpush.xpose.msra.mxu0 %v451
        %474 = vmatpush.xpose.msra.mxu0 %v450
        %475 = vmatpush.xpose.msra.mxu0 %v449
        %476 = vmatpush.xpose.msra.mxu0 %v448
        %477 = vmatpush.xpose.msra.mxu0 %v447
        %478 = vmatpush.xpose.msra.mxu0 %v446
        %479 = vmatmul.f32.gmra.mxu0 %v462
        %v480 = vpop.f32.mrf.mxu0
        %v481 = vadd.f32 0.0, %v480
        %482 = vdwg.mxu0
        %483 = vst [vmem:[%s290] sm:$0xff] %v481
        %v484 = vld [vmem:[#allocation2 + $0x8] sm:$0xff]
        %485 = vmatpush.xpose.msra.mxu0 %v461
        %486 = vmatpush.xpose.msra.mxu0 %v460
        %487 = vmatpush.xpose.msra.mxu0 %v459
        %488 = vmatpush.xpose.msra.mxu0 %v458
        %489 = vmatpush.xpose.msra.mxu0 %v457
        %490 = vmatpush.xpose.msra.mxu0 %v456
        %491 = vmatpush.xpose.msra.mxu0 %v455
        %492 = vmatpush.xpose.msra.mxu0 %v454
        %493 = vmatpush.xpose.msra.mxu0 %v453
        %494 = vmatpush.xpose.msra.mxu0 %v452
        %495 = vmatpush.xpose.msra.mxu0 %v451
        %496 = vmatpush.xpose.msra.mxu0 %v450
        %497 = vmatpush.xpose.msra.mxu0 %v449
        %498 = vmatpush.xpose.msra.mxu0 %v448
        %499 = vmatpush.xpose.msra.mxu0 %v447
        %500 = vmatpush.xpose.msra.mxu0 %v446
        %501 = vmatmul.f32.gmra.mxu0 %v484
        %v502 = vpop.f32.mrf.mxu0
        %v503 = vadd.f32 0.0, %v502
        %504 = vdwg.mxu0
        %s505 = scalar_lea.vmem %s290, 8 [#allocation9]
        %506 = vst [vmem:[%s505] sm:$0xff] %v503
        %v507 = vld [vmem:[#allocation2 + $0x10] sm:$0xff]
        %508 = vmatpush.xpose.msra.mxu0 %v461
        %509 = vmatpush.xpose.msra.mxu0 %v460
        %510 = vmatpush.xpose.msra.mxu0 %v459
        %511 = vmatpush.xpose.msra.mxu0 %v458
        %512 = vmatpush.xpose.msra.mxu0 %v457
        %513 = vmatpush.xpose.msra.mxu0 %v456
        %514 = vmatpush.xpose.msra.mxu0 %v455
        %515 = vmatpush.xpose.msra.mxu0 %v454
        %516 = vmatpush.xpose.msra.mxu0 %v453
        %517 = vmatpush.xpose.msra.mxu0 %v452
        %518 = vmatpush.xpose.msra.mxu0 %v451
        %519 = vmatpush.xpose.msra.mxu0 %v450
        %520 = vmatpush.xpose.msra.mxu0 %v449
        %521 = vmatpush.xpose.msra.mxu0 %v448
        %522 = vmatpush.xpose.msra.mxu0 %v447
        %523 = vmatpush.xpose.msra.mxu0 %v446
        %524 = vmatmul.f32.gmra.mxu0 %v507
        %v525 = vpop.f32.mrf.mxu0
        %v526 = vadd.f32 0.0, %v525
        %527 = vdwg.mxu0
        %s528 = scalar_lea.vmem %s290, 16 [#allocation9]
        %529 = vst [vmem:[%s528] sm:$0xff] %v526
        %v530 = vld [vmem:[#allocation2 + $0x18] sm:$0xff]
        %531 = vmatpush.xpose.msra.mxu0 %v461
        %532 = vmatpush.xpose.msra.mxu0 %v460
        %533 = vmatpush.xpose.msra.mxu0 %v459
        %534 = vmatpush.xpose.msra.mxu0 %v458
        %535 = vmatpush.xpose.msra.mxu0 %v457
        %536 = vmatpush.xpose.msra.mxu0 %v456
        %537 = vmatpush.xpose.msra.mxu0 %v455
        %538 = vmatpush.xpose.msra.mxu0 %v454
        %539 = vmatpush.xpose.msra.mxu0 %v453
        %540 = vmatpush.xpose.msra.mxu0 %v452
        %541 = vmatpush.xpose.msra.mxu0 %v451
        %542 = vmatpush.xpose.msra.mxu0 %v450
        %543 = vmatpush.xpose.msra.mxu0 %v449
        %544 = vmatpush.xpose.msra.mxu0 %v448
        %545 = vmatpush.xpose.msra.mxu0 %v447
        %546 = vmatpush.xpose.msra.mxu0 %v446
        %547 = vmatmul.f32.gmra.mxu0 %v530
        %v548 = vpop.f32.mrf.mxu0
        %v549 = vadd.f32 0.0, %v548
        %550 = vdwg.mxu0
        %s551 = scalar_lea.vmem %s290, 24 [#allocation9]
        %552 = vst [vmem:[%s551] sm:$0xff] %v549
        %s553 = sand.u32 %s143, 1
        %s554 = scalar_lea.sflag [#allocation5], %s553
        %s555 = sand.u32 %s143, 1
        %s556 = smul.addr %s555, 32
        %s557 = scalar_lea.vmem [#allocation9], %s556
        // Predicated region
        $region49: #{tpu_custom_call.1} parent=31 // pred_check
          %p558 = pneg %p153
        $region50: #{tpu_custom_call.1} parent=31 // pred_check_branch
          %560 = sbr.rel (%p558) target = $region52
        $region51: #{tpu_custom_call.1} parent=31 // pred_region
          %s561 = smul.u32 4, %s27
          %563 = vsyncadd %s554, 0
          %s564 = sadd.s32 %s30, %s29
          %s565 = sadd.s32 %s564, %s561
          %s566 = smul.addr %s28, 4
          %s567 = sadd.s32 %s565, %s566
          %s568 = smul.addr %s567, 8
          %s569 = scalar_lea.hbm %s3, %s568
          %s570 = sshll.u32 %s557, 4
          %s571 = int_to_ptr.vmem [resolvable:$true] %s570
          %s572 = sshll.u32 %s569, 4
          %s573 = int_to_ptr.hbm [resolvable:$true] %s572
          %578 = dma.vmem_to_hbm [thread:$0]  %s571, 512, %s573, %s554, 128, 128, 8
        $region52: #{tpu_custom_call.1} parent=31 // pred_fallthru
          _
      $region32: #{tpu_custom_call.1} parent=5 // pred_fallthru
        _
      %p579 = scmp.le.s32.totalorder 2, %s16
      // Predicated region
      $region53: #{tpu_custom_call.1} parent=5 // pred_check
        %p580 = pneg %p579
      $region54: #{tpu_custom_call.1} parent=5 // pred_check_branch
        %582 = sbr.rel (%p580) target = $region56
      $region55: #{tpu_custom_call.1} parent=5 // pred_region
        %s583 = ssub.s32 %s16, 2
        // Predicated region
        $region57: #{tpu_custom_call.1} parent=55 // pred_check
          %p584 = pneg %p159
        $region58: #{tpu_custom_call.1} parent=55 // pred_check_branch
          %586 = sbr.rel (%p584) target = $region60
        $region59: #{tpu_custom_call.1} parent=55 // pred_region
          %s587 = sand.u32 %s144, 1
          %s588 = scalar_lea.sflag [#allocation5], %s587
          %s589 = sand.u32 %s144, 1
          %s590 = smul.addr %s589, 32
          %s591 = scalar_lea.vmem [#allocation9], %s590
          %593 = dma.done %s588, 512
        $region60: #{tpu_custom_call.1} parent=55 // pred_fallthru
          _
      $region56: #{tpu_custom_call.1} parent=5 // pred_fallthru
        _
    $region6: #{tpu_custom_call.1} parent=1 // loop_footer
      %s20 = sadd.s32 1, %s16
    $region7: #{tpu_custom_call.1} parent=1 // loop_footer_branch
      %15 = sbr.rel target = $region3
    $region8: #{tpu_custom_call.1} parent=1 // loop_exit
      _
    %594 = vsyncpa [#allocation4], 1
    %s595 = scalar_lea.sflag [#allocation4], 1
    %596 = vsyncpa %s595, 1
    %597 = vsyncpa [#allocation7], 1
    %598 = vsyncpa [#allocation5], 1
    %s599 = scalar_lea.sflag [#allocation5], 1
    %600 = vsyncpa %s599, 1

</llo_original>
